<compile_context>
chip_gen: v5e
topology: v5e:2x2
jax: 0.10.0
libtpu: 0.0.40
codegen_flags: <defaults>
</compile_context>

<pallas_src>
import math

import jax
import jax.numpy as jnp
import numpy as np
from jax import lax
from jax.experimental import pallas as pl
from jax.experimental.pallas import tpu as pltpu

LRELU_ALPHA = 0.2
LRELU_GAIN = math.sqrt(2.0)


# --------------------------------------------------------------------------
# Tile selection (generation-aware VMEM budget, lane-dense pixel tiles)
# --------------------------------------------------------------------------
def _vmem_budget_bytes():
    """Budget for the streamed (double-buffered) in/out blocks of one grid step."""
    try:
        cap = int(pltpu.get_tpu_info().vmem_capacity_bytes)
    except Exception:
        cap = 64 * 1024 * 1024      # conservative: v7x per-TC VMEM
    return min(cap // 4, 12 * 1024 * 1024)


def _pick_pixel_tile(p_pad, batch, cin, cout, itemsize, budget_bytes):
    """Largest lane-dense pixel tile that divides P, fits the VMEM budget, and
    leaves >=2 grid steps when possible (pipeline overlap / v7x megacore)."""
    cands = (32768, 16384, 8192, 4096, 2048, 1024, 512, 256, 128)
    bytes_per_pixel = (cin + cout) * itemsize
    best = 128
    for tp in cands:
        if tp > p_pad or p_pad % tp != 0:
            continue
        if 2 * tp * bytes_per_pixel > budget_bytes:   # double-buffered in+out
            continue
        best = tp
        break
    if batch * (p_pad // best) < 2:                   # keep >=2 grid steps if we can
        for tp in cands:
            if tp < p_pad and p_pad % tp == 0:
                best = tp
                break
    return best


def _pick_chunk(tp):
    """vreg-sized inner chunk of the pixel tile (keeps live set ~30 vregs)."""
    for c in (512, 256, 128):
        if tp % c == 0:
            return c
    return tp


# --------------------------------------------------------------------------
# Fused kernel
# --------------------------------------------------------------------------
def _build_kernel(ch, tp, chunk):
    """ch = (C0, C1, C2, C3, C4); tp = pixel tile; chunk = inner pixel chunk."""
    C0, C1, C2, C3, C4 = ch
    n_chunks = tp // chunk

    def kernel(x_ref, w_ref, b_ref, o_ref):
        # x_ref: (1, C0, tp)      input pixels, channels on sublanes
        # w_ref: (1, 4, CP, CP)   per-batch modulated (and gain-folded) weights
        # b_ref: (4, CP, 1)       per-layer biases (gain-folded, zero-padded)
        # o_ref: (1, C4, tp)

        # Hoist the tiny weight slabs / bias columns once per block.
        w1 = w_ref[0, 0, :C1, :C0]
        w2 = w_ref[0, 1, :C2, :C1]
        w3 = w_ref[0, 2, :C3, :C2]
        w4 = w_ref[0, 3, :C4, :C3]
        b1 = b_ref[0, :C1, :]
        b2 = b_ref[1, :C2, :]
        b3 = b_ref[2, :C3, :]
        b4 = b_ref[3, :C4, :]

        def lrelu(y):                     # gains already folded into weights
            return jnp.maximum(y, LRELU_ALPHA * y)

        def chain(xc):                    # xc: (C0, chunk) f32
            h = lrelu(jnp.dot(w1, xc, preferred_element_type=jnp.float32) + b1)
            h = lrelu(jnp.dot(w2, h, preferred_element_type=jnp.float32) + b2)
            h = lrelu(jnp.dot(w3, h, preferred_element_type=jnp.float32) + b3)
            h = lrelu(jnp.dot(w4, h, preferred_element_type=jnp.float32) + b4)
            return h

        if n_chunks == 1:
            o_ref[0] = chain(x_ref[0].astype(jnp.float32)).astype(o_ref.dtype)
        else:
            def body(c, carry):
                off = pl.multiple_of(c * chunk, 128)
                xc = x_ref[0, :, pl.ds(off, chunk)].astype(jnp.float32)
                o_ref[0, :, pl.ds(off, chunk)] = chain(xc).astype(o_ref.dtype)
                return carry
            lax.fori_loop(0, n_chunks, body, None, unroll=(n_chunks <= 8))

    return kernel


# --------------------------------------------------------------------------
# Wrapper: affine styles, weight packing (style + gain folding), pallas_call
# --------------------------------------------------------------------------
def torgb_deeper_modconv(x_nchw, w_latent, params):
    """ToRGBLayerDeeperModulatedConv forward.

    x_nchw:   [B, Cin, H, W]
    w_latent: [B, w_dim]
    params:   dict of module parameters (see init_params).
    """
    B, Cin, H, W = x_nchw.shape
    P = H * W
    w_dim = w_latent.shape[1]
    ch = params["channels"]                   # [Cin, c1, c2, c3, Cout]
    Cout = ch[4]
    CP = max(8, ((max(ch) + 7) // 8) * 8)     # padded channel dim for packing

    # ---- affine (FullyConnectedLayer, linear act) + per-layer weight gain ----
    def affine(A, b_aff, conv_in_ch):
        wg = 1.0 / math.sqrt(w_dim)           # FullyConnectedLayer.weight_gain
        styles = w_latent @ (A * wg).T + b_aff[None, :]
        return styles * (1.0 / math.sqrt(conv_in_ch))   # weight_gain_k (ks=1)

    styles = [
        affine(params["A1"], params["ab1"], ch[0]),
        affine(params["A2"], params["ab2"], ch[1]),
        affine(params["A3"], params["ab3"], ch[2]),
        affine(params["A4"], params["ab4"], ch[3]),
    ]

    # ---- fold styles (demodulate=False) AND lrelu gains into packed weights ----
    # layer k>1 absorbs the previous layer's sqrt(2); layer 4 also absorbs its
    # own output gain (into both W4 and b4), so the kernel never multiplies.
    w_scale = (1.0, LRELU_GAIN, LRELU_GAIN, LRELU_GAIN * LRELU_GAIN)
    b_scale = (1.0, 1.0, 1.0, LRELU_GAIN)
    wpack = jnp.zeros((B, 4, CP, CP), jnp.float32)
    bpack = jnp.zeros((4, CP, 1), jnp.float32)
    for k in range(4):
        Wk = params[f"W{k + 1}"][:, :, 0, 0]                      # (co, ci)
        co, ci = Wk.shape
        wmod = (Wk[None, :, :] * styles[k][:, None, :]) * w_scale[k]
        wpack = wpack.at[:, k, :co, :ci].set(wmod)
        bpack = bpack.at[k, :co, 0].set(params[f"b{k + 1}"] * b_scale[k])

    # ---- channels-first pixel layout; pad pixel axis to a multiple of 128 ----
    x_bcp = x_nchw.reshape(B, Cin, P)
    P_pad = ((P + 127) // 128) * 128
    if P_pad != P:
        x_bcp = jnp.pad(x_bcp, ((0, 0), (0, 0), (0, P_pad - P)))

    itemsize = jnp.dtype(x_nchw.dtype).itemsize
    TP = _pick_pixel_tile(P_pad, B, Cin, Cout, itemsize, _vmem_budget_bytes())
    CH = _pick_chunk(TP)
    n_tiles = P_pad // TP

    out_bcp = pl.pallas_call(
        _build_kernel(tuple(ch), TP, CH),
        out_shape=jax.ShapeDtypeStruct((B, Cout, P_pad), x_nchw.dtype),
        grid_spec=pltpu.PrefetchScalarGridSpec(
            num_scalar_prefetch=0,
            grid=(B, n_tiles),
            in_specs=[
                pl.BlockSpec((1, Cin, TP), lambda b, p: (b, 0, p)),
                pl.BlockSpec((1, 4, CP, CP), lambda b, p: (b, 0, 0, 0)),
                pl.BlockSpec((4, CP, 1), lambda b, p: (0, 0, 0)),
            ],
            out_specs=pl.BlockSpec((1, Cout, TP), lambda b, p: (b, 0, p)),
        ),
        compiler_params=pltpu.CompilerParams(
            dimension_semantics=("parallel", "parallel"),
            vmem_limit_bytes=32 * 1024 * 1024),
    )(x_bcp, wpack, bpack)

    if P_pad != P:
        out_bcp = out_bcp[:, :, :P]
    return out_bcp.reshape(B, Cout, H, W)


# --------------------------------------------------------------------------
# Parameters & pure-JAX reference
# --------------------------------------------------------------------------
def init_params(key, in_channels, out_channels, w_dim, intermediate_channels=16):
    """Deterministic synthetic parameter init mirroring the module's __init__."""
    ic = [intermediate_channels] * 3
    ch = [in_channels, ic[0], ic[1], ic[2], out_channels]
    keys = jax.random.split(key, 8)

    def randn(k, shape):
        return jax.random.normal(k, shape, dtype=jnp.float32)

    return {
        "channels": ch,
        # affine FC layers: weight ~ randn([out,in]), bias init = 1.0
        "A1": randn(keys[0], (ch[0], w_dim)), "ab1": jnp.ones((ch[0],), jnp.float32),
        "A2": randn(keys[1], (ch[1], w_dim)), "ab2": jnp.ones((ch[1],), jnp.float32),
        "A3": randn(keys[2], (ch[2], w_dim)), "ab3": jnp.ones((ch[2],), jnp.float32),
        "A4": randn(keys[3], (ch[3], w_dim)), "ab4": jnp.ones((ch[3],), jnp.float32),
        # conv weights [out, in, 1, 1] ~ randn, conv biases = 0
        "W1": randn(keys[4], (ch[1], ch[0], 1, 1)), "b1": jnp.zeros((ch[1],), jnp.float32),
        "W2": randn(keys[5], (ch[2], ch[1], 1, 1)), "b2": jnp.zeros((ch[2],), jnp.float32),
        "W3": randn(keys[6], (ch[3], ch[2], 1, 1)), "b3": jnp.zeros((ch[3],), jnp.float32),
        "W4": randn(keys[7], (ch[4], ch[3], 1, 1)), "b4": jnp.zeros((ch[4],), jnp.float32),
    }


def torgb_reference(x_nchw, w_latent, params):
    """Pure-JAX reference mirroring the PyTorch fused-modconv path exactly."""
    w_dim = w_latent.shape[1]
    ch = params["channels"]

    def affine(A, b_aff, cin):
        return (w_latent @ (A * (1.0 / math.sqrt(w_dim))).T + b_aff[None, :]) \
               * (1.0 / math.sqrt(cin))

    def mod_conv1x1(x, weight, st):
        wmod = weight[None, :, :, 0, 0] * st[:, None, :]
        return jnp.einsum("boi,bihw->bohw", wmod, x)

    def bias_act(x, b):
        y = x + b[None, :, None, None]
        return jnp.where(y >= 0.0, y, LRELU_ALPHA * y) * LRELU_GAIN

    h = x_nchw
    h = bias_act(mod_conv1x1(h, params["W1"], affine(params["A1"], params["ab1"], ch[0])), params["b1"])
    h = bias_act(mod_conv1x1(h, params["W2"], affine(params["A2"], params["ab2"], ch[1])), params["b2"])
    h = bias_act(mod_conv1x1(h, params["W3"], affine(params["A3"], params["ab3"], ch[2])), params["b3"])
    h = bias_act(mod_conv1x1(h, params["W4"], affine(params["A4"], params["ab4"], ch[3])), params["b4"])
    return h


if __name__ == "__main__":
    B, Cin, H, W = 2, 4, 16, 16
    w_dim = 32
    out_channels = 3

    key = jax.random.PRNGKey(0)
    kx, kw, kp = jax.random.split(key, 3)
    x = jax.random.normal(kx, (B, Cin, H, W), dtype=jnp.float32)
    w_latent = jax.random.normal(kw, (B, w_dim), dtype=jnp.float32)
    params = init_params(kp, Cin, out_channels, w_dim, intermediate_channels=16)

    out = torgb_deeper_modconv(x, w_latent, params)
    out = jax.block_until_ready(out)

    ref = jax.block_until_ready(torgb_reference(x, w_latent, params))
    np.testing.assert_allclose(np.asarray(out), np.asarray(ref), rtol=1e-4, atol=1e-4)

    assert out.shape == (B, out_channels, H, W)
    print("KERNEL_OK")
</pallas_src>

<mosaic_0001>
module attributes {stable_mosaic.version = 11 : i64} {
  func.func @kernel(%arg0: i32, %arg1: i32, %arg2: memref<1x4x256xf32, #tpu.memory_space<vmem>>, %arg3: memref<1x4x16x16xf32, #tpu.memory_space<vmem>>, %arg4: memref<4x16x1xf32, #tpu.memory_space<vmem>>, %arg5: memref<1x3x256xf32, #tpu.memory_space<vmem>>) attributes {dimension_semantics = [#tpu.dimension_semantics<parallel>, #tpu.dimension_semantics<parallel>], iteration_bounds = array<i64: 2, 1>, scalar_prefetch = 0 : i64, scratch_operands = 0 : i64, tpu.core_type = #tpu.core_type<tc>, window_params = [{transform_indices = @transform_0, window_bounds = array<i64: 1, 4, 256>}, {transform_indices = @transform_1, window_bounds = array<i64: 1, 4, 16, 16>}, {pipeline_mode = #tpu.pipeline_mode<synchronous>, transform_indices = @transform_2, window_bounds = array<i64: 4, 16, 1>}, {transform_indices = @transform_3, window_bounds = array<i64: 1, 3, 256>}]} {
    %c0 = arith.constant 0 : index
    %c0_0 = arith.constant 0 : index
    %c0_1 = arith.constant 0 : index
    %c0_2 = arith.constant 0 : index
    %0 = vector.load %arg3[%c0, %c0_0, %c0_1, %c0_2] : memref<1x4x16x16xf32, #tpu.memory_space<vmem>>, vector<1x1x16x4xf32>
    %1 = vector.shape_cast %0 : vector<1x1x16x4xf32> to vector<16x4xf32>
    %c0_3 = arith.constant 0 : index
    %c1 = arith.constant 1 : index
    %c0_4 = arith.constant 0 : index
    %c0_5 = arith.constant 0 : index
    %2 = vector.load %arg3[%c0_3, %c1, %c0_4, %c0_5] : memref<1x4x16x16xf32, #tpu.memory_space<vmem>>, vector<1x1x16x16xf32>
    %3 = vector.shape_cast %2 : vector<1x1x16x16xf32> to vector<16x16xf32>
    %c0_6 = arith.constant 0 : index
    %c2 = arith.constant 2 : index
    %c0_7 = arith.constant 0 : index
    %c0_8 = arith.constant 0 : index
    %4 = vector.load %arg3[%c0_6, %c2, %c0_7, %c0_8] : memref<1x4x16x16xf32, #tpu.memory_space<vmem>>, vector<1x1x16x16xf32>
    %5 = vector.shape_cast %4 : vector<1x1x16x16xf32> to vector<16x16xf32>
    %c0_9 = arith.constant 0 : index
    %c3 = arith.constant 3 : index
    %c0_10 = arith.constant 0 : index
    %c0_11 = arith.constant 0 : index
    %6 = vector.load %arg3[%c0_9, %c3, %c0_10, %c0_11] : memref<1x4x16x16xf32, #tpu.memory_space<vmem>>, vector<1x1x3x16xf32>
    %7 = vector.shape_cast %6 : vector<1x1x3x16xf32> to vector<3x16xf32>
    %c0_12 = arith.constant 0 : index
    %c0_13 = arith.constant 0 : index
    %c0_14 = arith.constant 0 : index
    %8 = vector.load %arg4[%c0_12, %c0_13, %c0_14] : memref<4x16x1xf32, #tpu.memory_space<vmem>>, vector<1x16x1xf32>
    %9 = vector.shape_cast %8 : vector<1x16x1xf32> to vector<16x1xf32>
    %c1_15 = arith.constant 1 : index
    %c0_16 = arith.constant 0 : index
    %c0_17 = arith.constant 0 : index
    %10 = vector.load %arg4[%c1_15, %c0_16, %c0_17] : memref<4x16x1xf32, #tpu.memory_space<vmem>>, vector<1x16x1xf32>
    %11 = vector.shape_cast %10 : vector<1x16x1xf32> to vector<16x1xf32>
    %c2_18 = arith.constant 2 : index
    %c0_19 = arith.constant 0 : index
    %c0_20 = arith.constant 0 : index
    %12 = vector.load %arg4[%c2_18, %c0_19, %c0_20] : memref<4x16x1xf32, #tpu.memory_space<vmem>>, vector<1x16x1xf32>
    %13 = vector.shape_cast %12 : vector<1x16x1xf32> to vector<16x1xf32>
    %c3_21 = arith.constant 3 : index
    %c0_22 = arith.constant 0 : index
    %c0_23 = arith.constant 0 : index
    %14 = vector.load %arg4[%c3_21, %c0_22, %c0_23] : memref<4x16x1xf32, #tpu.memory_space<vmem>>, vector<1x3x1xf32>
    %15 = vector.shape_cast %14 : vector<1x3x1xf32> to vector<3x1xf32>
    %c0_24 = arith.constant 0 : index
    %c0_25 = arith.constant 0 : index
    %c0_26 = arith.constant 0 : index
    %16 = vector.load %arg2[%c0_24, %c0_25, %c0_26] : memref<1x4x256xf32, #tpu.memory_space<vmem>>, vector<1x4x256xf32>
    %17 = vector.shape_cast %16 : vector<1x4x256xf32> to vector<4x256xf32>
    %cst = arith.constant dense<0.000000e+00> : vector<16x256xf32>
    %18 = tpu.matmul %1, %17, %cst {dimension_numbers = #tpu.dot_dimension_numbers<[1], [0], [0], [1], [0, 0, 1, 1], [], []>} : vector<16x4xf32>, vector<4x256xf32>, vector<16x256xf32> -> vector<16x256xf32>
    %19 = vector.broadcast %9 : vector<16x1xf32> to vector<16x256xf32>
    %20 = arith.addf %18, %19 : vector<16x256xf32>
    %cst_27 = arith.constant 2.000000e-01 : f32
    %21 = vector.broadcast %cst_27 : f32 to vector<16x256xf32>
    %22 = arith.mulf %21, %20 : vector<16x256xf32>
    %23 = arith.maximumf %20, %22 : vector<16x256xf32>
    %cst_28 = arith.constant dense<0.000000e+00> : vector<16x256xf32>
    %24 = tpu.matmul %3, %23, %cst_28 {dimension_numbers = #tpu.dot_dimension_numbers<[1], [0], [0], [1], [0, 0, 1, 1], [], []>} : vector<16x16xf32>, vector<16x256xf32>, vector<16x256xf32> -> vector<16x256xf32>
    %25 = vector.broadcast %11 : vector<16x1xf32> to vector<16x256xf32>
    %26 = arith.addf %24, %25 : vector<16x256xf32>
    %cst_29 = arith.constant 2.000000e-01 : f32
    %27 = vector.broadcast %cst_29 : f32 to vector<16x256xf32>
    %28 = arith.mulf %27, %26 : vector<16x256xf32>
    %29 = arith.maximumf %26, %28 : vector<16x256xf32>
    %cst_30 = arith.constant dense<0.000000e+00> : vector<16x256xf32>
    %30 = tpu.matmul %5, %29, %cst_30 {dimension_numbers = #tpu.dot_dimension_numbers<[1], [0], [0], [1], [0, 0, 1, 1], [], []>} : vector<16x16xf32>, vector<16x256xf32>, vector<16x256xf32> -> vector<16x256xf32>
    %31 = vector.broadcast %13 : vector<16x1xf32> to vector<16x256xf32>
    %32 = arith.addf %30, %31 : vector<16x256xf32>
    %cst_31 = arith.constant 2.000000e-01 : f32
    %33 = vector.broadcast %cst_31 : f32 to vector<16x256xf32>
    %34 = arith.mulf %33, %32 : vector<16x256xf32>
    %35 = arith.maximumf %32, %34 : vector<16x256xf32>
    %cst_32 = arith.constant dense<0.000000e+00> : vector<3x256xf32>
    %36 = tpu.matmul %7, %35, %cst_32 {dimension_numbers = #tpu.dot_dimension_numbers<[1], [0], [0], [1], [0, 0, 1, 1], [], []>} : vector<3x16xf32>, vector<16x256xf32>, vector<3x256xf32> -> vector<3x256xf32>
    %37 = vector.broadcast %15 : vector<3x1xf32> to vector<3x256xf32>
    %38 = arith.addf %36, %37 : vector<3x256xf32>
    %cst_33 = arith.constant 2.000000e-01 : f32
    %39 = vector.broadcast %cst_33 : f32 to vector<3x256xf32>
    %40 = arith.mulf %39, %38 : vector<3x256xf32>
    %41 = arith.maximumf %38, %40 : vector<3x256xf32>
    %c0_34 = arith.constant 0 : index
    %c0_35 = arith.constant 0 : index
    %c0_36 = arith.constant 0 : index
    %42 = vector.load %arg5[%c0_34, %c0_35, %c0_36] : memref<1x3x256xf32, #tpu.memory_space<vmem>>, vector<1x3x256xf32>
    %43 = vector.shape_cast %42 : vector<1x3x256xf32> to vector<3x256xf32>
    %44 = vector.shape_cast %41 : vector<3x256xf32> to vector<1x3x256xf32>
    tpu.vector_store %arg5[%c0_34, %c0_35, %c0_36], %44 {strides = array<i32>} : memref<1x3x256xf32, #tpu.memory_space<vmem>>, vector<1x3x256xf32>,
    return
  }
  func.func @transform_0(%arg0: i32, %arg1: i32) -> (i32, i32, i32) {
    %c0_i32 = arith.constant 0 : i32
    %c0_i32_0 = arith.constant 0 : i32
    return %arg0, %c0_i32, %arg1 : i32, i32, i32
  }
  func.func @transform_1(%arg0: i32, %arg1: i32) -> (i32, i32, i32, i32) {
    %c0_i32 = arith.constant 0 : i32
    %c0_i32_0 = arith.constant 0 : i32
    %c0_i32_1 = arith.constant 0 : i32
    %c0_i32_2 = arith.constant 0 : i32
    return %arg0, %c0_i32, %c0_i32_0, %c0_i32_1 : i32, i32, i32, i32
  }
  func.func @transform_2(%arg0: i32, %arg1: i32) -> (i32, i32, i32) {
    %c0_i32 = arith.constant 0 : i32
    %c0_i32_0 = arith.constant 0 : i32
    %c0_i32_1 = arith.constant 0 : i32
    %c0_i32_2 = arith.constant 0 : i32
    return %c0_i32, %c0_i32_0, %c0_i32_1 : i32, i32, i32
  }
  func.func @transform_3(%arg0: i32, %arg1: i32) -> (i32, i32, i32) {
    %c0_i32 = arith.constant 0 : i32
    %c0_i32_0 = arith.constant 0 : i32
    return %arg0, %c0_i32, %arg1 : i32, i32, i32
  }
}

</mosaic_0001>

<llo_original>
// kernel: tpu_custom_call.1
$region0: #{tpu_custom_call.1}
  #allocation0 [shape = 'u32[]', space=smem, size = 0x4, offset = 0x4, fixed_abs, tag = 'smem constant byte address 0x4 - core index']
  #allocation1 [shape = 'u32[72,128]{1,0:T(1,128)}', space=vmem, size = 0x9000, scoped, tag = 'internal scratch']
  %s0 = inlined_call_operand.vmem [shape: f32[2,4,256], index: 0, kind: input, shape index: {}]
  %s1 = inlined_call_operand.hbm [shape: f32[2,4,16,16], index: 1, kind: input, shape index: {}]
  %s2 = inlined_call_operand.vmem [shape: f32[4,16,1], index: 2, kind: input, shape index: {}]
  %s3 = inlined_call_operand.vmem [shape: f32[2,3,256], index: 3, kind: output, shape index: {}]
  %s4 = sld [smem:[#allocation0]]
  $region49: #{tpu_custom_call.1} parent=0
    _
  %s6 = ssub.s32 1, %s4
  %s7 = scalar_select 0, %s6, %s4
  $region1: #{tpu_custom_call.1} parent=0
    #allocation2 [shape = 'u8[65536]{0}', space=vmem, size = 0x10000, scoped, tag = 'input window, operand 1']
    #allocation3 [shape = 's32[2]{0}', space=sflag, size = 0x8, scoped, tag = 'scoped memory for tpu_custom_call.1']
    %8 = vsyncpa [#allocation3], 0
    %s9 = scalar_lea.sflag [#allocation3], 1
    %10 = vsyncpa %s9, 0
    loop: start=0, step=1, limit=4
    $region2: #{tpu_custom_call.1} parent=1 // loop_pre_header
      _
    $region3: #{tpu_custom_call.1} parent=1 // loop_header
      %s12 = sphi 0, %s16
      %p13 = scmp.ge.s32.totalorder %s12, 4
      %s19 = sphi 0, %s31
      %s20 = sphi 0, %s27
      %s21 = sphi 0, %s19
      %s22 = sphi 0, %s20
      %s23 = sphi 0, %s21
      %s24 = sphi 0, %s22
      %s36 = sphi 0, %s38
      %s39 = sphi 0, %s36
      %s40 = sphi 0, %s39
      %s56 = sphi 0, %s40
      %s62 = sphi 0, %s64
      %s65 = sphi 0, %s62
      %s66 = sphi 0, %s65
      %s82 = sphi 0, %s66
      %s86 = sphi 0, %s86
      %s88 = sphi 0, %s86
      %s89 = sphi 0, %s88
      %s103 = sphi 0, %s89
      %s111 = sphi 0, %s113
      %s114 = sphi 0, %s111
      %s115 = sphi 0, %s114
      %s131 = sphi 0, %s115
    $region4: #{tpu_custom_call.1} parent=1 // loop_header_branch
      %15 = sbr.rel (%p13) target = $region8
    $region5: #{tpu_custom_call.1} parent=1 // loop_body
      %s17 = ssub.s32 %s12, 1
      %s18 = ssub.s32 %s12, 2
      %s25 = sadd.s32 1, %s20
      %p26 = scmp.ge.s32.totalorder %s25, 1
      %s27 = scalar_select %p26, 0, %s25
      %s28 = sadd.s32 1, %s19
      %s29 = scalar_select %p26, %s28, %s19
      %p30 = scmp.ge.s32.totalorder %s29, 2
      %s31 = scalar_select %p30, 0, %s29
      %s32 = ssub.s32 %s19, %s31
      %s33 = ssub.s32 %s20, %s27
      %s34 = sor.u32 %s32, %s33
      %p35 = scmp.eq.s32.totalorder %s34, 0
      %s37 = sadd.s32 %s36, 1
      %s38 = scalar_select %p35, %s36, %s37
      %p41 = pneg %p35
      %p42 = scmp.eq.s32.totalorder %s12, 1
      %p43 = por %p41, %p42
      %p44 = scmp.ne.s32.totalorder %s36, %s39
      %p45 = scmp.eq.s32.totalorder %s12, 0
      %p46 = por %p44, %p45
      %p47 = scmp.ne.s32.totalorder %s36, %s39
      %p48 = scmp.eq.s32.totalorder %s17, 1
      %p49 = por %p47, %p48
      %p50 = scmp.ne.s32.totalorder %s39, %s40
      %p51 = scmp.eq.s32.totalorder %s17, 0
      %p52 = por %p50, %p51
      %p53 = scmp.ne.s32.totalorder %s39, %s40
      %p54 = scmp.eq.s32.totalorder %s18, 1
      %p55 = por %p53, %p54
      %p57 = scmp.ne.s32.totalorder %s40, %s56
      %p58 = scmp.eq.s32.totalorder %s18, 0
      %p59 = por %p57, %p58
      %s60 = ssub.s32 %s19, %s31
      %p61 = scmp.eq.s32.totalorder %s60, 0
      %s63 = sadd.s32 %s62, 1
      %s64 = scalar_select %p61, %s62, %s63
      %p67 = pneg %p61
      %p68 = scmp.eq.s32.totalorder %s12, 1
      %p69 = por %p67, %p68
      %p70 = scmp.ne.s32.totalorder %s62, %s65
      %p71 = scmp.eq.s32.totalorder %s12, 0
      %p72 = por %p70, %p71
      %p73 = scmp.ne.s32.totalorder %s62, %s65
      %p74 = scmp.eq.s32.totalorder %s17, 1
      %p75 = por %p73, %p74
      %p76 = scmp.ne.s32.totalorder %s65, %s66
      %p77 = scmp.eq.s32.totalorder %s17, 0
      %p78 = por %p76, %p77
      %p79 = scmp.ne.s32.totalorder %s65, %s66
      %p80 = scmp.eq.s32.totalorder %s18, 1
      %p81 = por %p79, %p80
      %p83 = scmp.ne.s32.totalorder %s66, %s82
      %p84 = scmp.eq.s32.totalorder %s18, 0
      %p85 = por %p83, %p84
      %s87 = sadd.s32 %s86, 1
      %p90 = scmp.eq.s32.totalorder %s12, 1
      %p91 = scmp.ne.s32.totalorder %s86, %s88
      %p92 = scmp.eq.s32.totalorder %s12, 0
      %p93 = por %p91, %p92
      %p94 = scmp.ne.s32.totalorder %s86, %s88
      %p95 = scmp.eq.s32.totalorder %s17, 1
      %p96 = por %p94, %p95
      %p97 = scmp.ne.s32.totalorder %s88, %s89
      %p98 = scmp.eq.s32.totalorder %s17, 0
      %p99 = por %p97, %p98
      %p100 = scmp.ne.s32.totalorder %s88, %s89
      %p101 = scmp.eq.s32.totalorder %s18, 1
      %p102 = por %p100, %p101
      %p104 = scmp.ne.s32.totalorder %s89, %s103
      %p105 = scmp.eq.s32.totalorder %s18, 0
      %p106 = por %p104, %p105
      %s107 = ssub.s32 %s19, %s31
      %s108 = ssub.s32 %s20, %s27
      %s109 = sor.u32 %s107, %s108
      %p110 = scmp.eq.s32.totalorder %s109, 0
      %s112 = sadd.s32 %s111, 1
      %s113 = scalar_select %p110, %s111, %s112
      %p116 = pneg %p110
      %p117 = scmp.eq.s32.totalorder %s12, 1
      %p118 = por %p116, %p117
      %p119 = scmp.ne.s32.totalorder %s111, %s114
      %p120 = scmp.eq.s32.totalorder %s12, 0
      %p121 = por %p119, %p120
      %p122 = scmp.ne.s32.totalorder %s111, %s114
      %p123 = scmp.eq.s32.totalorder %s17, 1
      %p124 = por %p122, %p123
      %p125 = scmp.ne.s32.totalorder %s114, %s115
      %p126 = scmp.eq.s32.totalorder %s17, 0
      %p127 = por %p125, %p126
      %p128 = scmp.ne.s32.totalorder %s114, %s115
      %p129 = scmp.eq.s32.totalorder %s18, 1
      %p130 = por %p128, %p129
      %p132 = scmp.ne.s32.totalorder %s115, %s131
      %p133 = scmp.eq.s32.totalorder %s18, 0
      %p134 = por %p132, %p133
      %p135 = scmp.le.s32.totalorder 1, %s12
      %p136 = scmp.lt.s32.totalorder %s12, 3
      %p137 = pnand %p135, %p136
      %p138 = pneg %p137
      // Predicated region
      $region9: #{tpu_custom_call.1} parent=5 // pred_check
        _
      $region10: #{tpu_custom_call.1} parent=5 // pred_check_branch
        %140 = sbr.rel (%p137) target = $region12
      $region11: #{tpu_custom_call.1} parent=5 // pred_region
        %s141 = ssub.s32 %s12, 1
        // Predicated region
        $region13: #{tpu_custom_call.1} parent=11 // pred_check
          %p142 = pneg %p99
        $region14: #{tpu_custom_call.1} parent=11 // pred_check_branch
          %144 = sbr.rel (%p142) target = $region16
        $region15: #{tpu_custom_call.1} parent=11 // pred_region
          _
        $region16: #{tpu_custom_call.1} parent=11 // pred_fallthru
          _
      $region12: #{tpu_custom_call.1} parent=5 // pred_fallthru
        _
      %p145 = scmp.lt.s32.totalorder %s12, 2
      // Predicated region
      $region17: #{tpu_custom_call.1} parent=5 // pred_check
        %p146 = pneg %p145
      $region18: #{tpu_custom_call.1} parent=5 // pred_check_branch
        %148 = sbr.rel (%p146) target = $region20
      $region19: #{tpu_custom_call.1} parent=5 // pred_region
        // Predicated region
        $region21: #{tpu_custom_call.1} parent=19 // pred_check
          %p149 = pneg %p46
        $region22: #{tpu_custom_call.1} parent=19 // pred_check_branch
          %151 = sbr.rel (%p149) target = $region24
        $region23: #{tpu_custom_call.1} parent=19 // pred_region
          %s152 = smul.u32 2, %s20
          %p153 = scmp.lt.s32.totalorder %s19, 1
          %s154 = scalar_select %p153, %s19, 1
          %p155 = scmp.lt.s32.totalorder %s152, 1
          %s156 = scalar_select %p155, %s152, 1
          %s157 = smul.addr %s154, 2
          %s158 = sadd.s32 %s156, %s157
          %s159 = smul.addr %s158, 4
          %s160 = scalar_lea.vmem %s0, %s159
          %s161 = smul.u32 2, %s20
        $region24: #{tpu_custom_call.1} parent=19 // pred_fallthru
          _
        // Predicated region
        $region25: #{tpu_custom_call.1} parent=19 // pred_check
          %p162 = pneg %p72
        $region26: #{tpu_custom_call.1} parent=19 // pred_check_branch
          %164 = sbr.rel (%p162) target = $region28
        $region27: #{tpu_custom_call.1} parent=19 // pred_region
          %s165 = sand.u32 %s62, 1
          %s166 = scalar_lea.sflag [#allocation3], %s165
          %s167 = sand.u32 %s62, 1
          %s168 = smul.addr %s167, 64
          %s169 = scalar_lea.vmem [#allocation2], %s168
          %171 = vsyncadd %s166, 0
          %s172 = smul.addr %s19, 8
          %s173 = smul.addr %s172, 8
          %s174 = scalar_lea.hbm %s1, %s173
          %s175 = sshll.u32 %s174, 4
          %s176 = int_to_ptr.hbm [resolvable:$true] %s175
          %s177 = sshll.u32 %s169, 4
          %s178 = int_to_ptr.vmem [resolvable:$true] %s177
          %183 = dma.hbm_to_vmem [thread:$0]  %s176, 1024, %s178, %s166, 128, 128, 8
        $region28: #{tpu_custom_call.1} parent=19 // pred_fallthru
          _
      $region20: #{tpu_custom_call.1} parent=5 // pred_fallthru
        _
      %p184 = scmp.le.s32.totalorder 1, %s12
      %p185 = scmp.lt.s32.totalorder %s12, 3
      %p186 = pnand %p184, %p185
      %p187 = pneg %p186
      // Predicated region
      $region29: #{tpu_custom_call.1} parent=5 // pred_check
        _
      $region30: #{tpu_custom_call.1} parent=5 // pred_check_branch
        %189 = sbr.rel (%p186) target = $region32
      $region31: #{tpu_custom_call.1} parent=5 // pred_region
        %s190 = ssub.s32 %s12, 1
        %s191 = sand.u32 %s65, 1
        %s192 = scalar_lea.sflag [#allocation3], %s191
        %s193 = sand.u32 %s65, 1
        %s194 = smul.addr %s193, 64
        %s195 = scalar_lea.vmem [#allocation2], %s194
        // Predicated region
        $region33: #{tpu_custom_call.1} parent=31 // pred_check
          %p196 = pneg %p78
        $region34: #{tpu_custom_call.1} parent=31 // pred_check_branch
          %198 = sbr.rel (%p196) target = $region36
        $region35: #{tpu_custom_call.1} parent=31 // pred_region
          %200 = dma.done %s192, 1024
        $region36: #{tpu_custom_call.1} parent=31 // pred_fallthru
          _
        %s201 = smul.u32 2, %s22
        %p202 = scmp.lt.s32.totalorder %s21, 1
        %s203 = scalar_select %p202, %s21, 1
        %p204 = scmp.lt.s32.totalorder %s201, 1
        %s205 = scalar_select %p204, %s201, 1
        %s206 = smul.addr %s203, 2
        %s207 = sadd.s32 %s205, %s206
        %s208 = smul.addr %s207, 4
        %s209 = scalar_lea.vmem %s0, %s208
        %p210 = pneg %p52
        %p211 = pneg %p49
        %s212 = sand.u32 %s65, 1
        %s213 = scalar_lea.sflag [#allocation3], %s212
        %s214 = sand.u32 %s65, 1
        %s215 = smul.addr %s214, 64
        %s216 = scalar_lea.vmem [#allocation2], %s215
        %p217 = pneg %p78
        %p218 = pneg %p75
        %p219 = pneg %p99
        %p220 = pneg %p96
        %p221 = pneg %p127
        %p222 = pneg %p124
        %s223 = smul.u32 2, %s22
        %p224 = scmp.lt.s32.totalorder %s21, 1
        %s225 = scalar_select %p224, %s21, 1
        %p226 = scmp.lt.s32.totalorder %s223, 1
        %s227 = scalar_select %p226, %s223, 1
        %s228 = smul.addr %s225, 2
        %s229 = sadd.s32 %s227, %s228
        %s230 = smul.addr %s229, 4
        %s231 = scalar_lea.vmem %s3, %s230
        %s232 = smul.u32 2, %s22
        %p233 = scmp.lt.s32.totalorder %s21, 1
        %s234 = scalar_select %p233, %s21, 1
        %p235 = scmp.lt.s32.totalorder %s232, 1
        %s236 = scalar_select %p235, %s232, 1
        %s237 = smul.addr %s234, 2
        %s238 = sadd.s32 %s236, %s237
        %s239 = smul.addr %s238, 4
        %s240 = scalar_lea.vmem %s0, %s239
        %s241 = smul.u32 2, %s22
        %s242 = smul.u32 2, %s22
        %p243 = scmp.lt.s32.totalorder %s21, 1
        %s244 = scalar_select %p243, %s21, 1
        %p245 = scmp.lt.s32.totalorder %s242, 1
        %s246 = scalar_select %p245, %s242, 1
        %s247 = smul.addr %s244, 2
        %s248 = sadd.s32 %s246, %s247
        %s249 = smul.addr %s248, 4
        %s250 = scalar_lea.vmem %s3, %s249
        %s251 = smul.u32 2, %s22
        %v252 = vld [vmem:[%s195] sm:$0xff]
        %v253 = vld [vmem:[%s195 + $0x8] sm:$0xff]
        %s254 = scalar_lea.vmem %s195, 16 [#allocation2]
        %v255 = vld [vmem:[%s254] sm:$0xff]
        %v256 = vld [vmem:[%s254 + $0x8] sm:$0xff]
        %s257 = scalar_lea.vmem %s195, 32 [#allocation2]
        %v258 = vld [vmem:[%s257] sm:$0xff]
        %v259 = vld [vmem:[%s257 + $0x8] sm:$0xff]
        %s260 = scalar_lea.vmem %s195, 48 [#allocation2]
        %v261 = vld [vmem:[%s260] sm:$0x7]
        %v262 = vld [vmem:[%s2] sm:$0xff]
        %v263 = vld [vmem:[%s2 + $0x8] sm:$0xff]
        %s264 = scalar_lea.vmem %s2, 16
        %v265 = vld [vmem:[%s264] sm:$0xff]
        %v266 = vld [vmem:[%s264 + $0x8] sm:$0xff]
        %s267 = scalar_lea.vmem %s2, 32
        %v268 = vld [vmem:[%s267] sm:$0xff]
        %v269 = vld [vmem:[%s267 + $0x8] sm:$0xff]
        %s270 = scalar_lea.vmem %s2, 48
        %v271 = vld [vmem:[%s270] sm:$0x7]
        %v272 = vld [vmem:[%s240] sm:$0xff]
        %274 = vset.pattern.permute.xlu0 0
        %275 = vperm.xlu0 %274, %v262
        %v276 = vpop.permute.xlu0 %275
        %279 = vset.pattern.permute.xlu0 0
        %280 = vperm.xlu0 %279, %v263
        %v281 = vpop.permute.xlu0 %280
        %284 = vst [vmem:[#allocation1] ss:$2 sm:$0xff] %v272
        %v285 = vld.sshfl [vmem:[#allocation1] sm:$0xff pattern:$0x75316420]
        %v286 = vld.sshfl [vmem:[#allocation1 + $0x8] sm:$0xff pattern:$0x75316420]
        %vm287 = vcmask 31744
        %v289 = vsel %vm287, %v252, 0
        %v292 = vsel %vm287, %v253, 0
        %vm294 = vcmask 1043456
        %v295 = vsel %vm294, %v285, 0
        %v297 = vsel %vm294, %v286, 0
        %299 = vmatpush.msra.mxu0 0.0
        %300 = vmatpush.msra.mxu0 0.0
        %301 = vmatpush.msra.mxu0 0.0
        %302 = vmatpush.msra.mxu0 0.0
        %303 = vmatpush.msra.mxu0 0.0
        %304 = vmatpush.msra.mxu0 0.0
        %305 = vmatpush.msra.mxu0 0.0
        %306 = vmatpush.msra.mxu0 0.0
        %307 = vmatpush.msra.mxu0 0.0
        %308 = vmatpush.msra.mxu0 0.0
        %309 = vmatpush.msra.mxu0 0.0
        %310 = vmatpush.msra.mxu0 0.0
        %311 = vmatpush.msra.mxu0 0.0
        %312 = vmatpush.msra.mxu0 0.0
        %313 = vmatpush.msra.mxu0 0.0
        %314 = vmatpush.msra.mxu0 %v295
        %315 = vmatmul.f32.gmra.mxu0 %v289
        %v316 = vpop.f32.mrf.mxu0
        %v317 = vadd.f32 %v276, %v316
        %318 = vmatmul.f32.gmra.mxu0 %v292
        %v319 = vpop.f32.mrf.mxu0
        %v320 = vadd.f32 %v281, %v319
        %321 = vdwg.mxu0
        %322 = vmatpush.msra.mxu0 0.0
        %323 = vmatpush.msra.mxu0 0.0
        %324 = vmatpush.msra.mxu0 0.0
        %325 = vmatpush.msra.mxu0 0.0
        %326 = vmatpush.msra.mxu0 0.0
        %327 = vmatpush.msra.mxu0 0.0
        %328 = vmatpush.msra.mxu0 0.0
        %329 = vmatpush.msra.mxu0 0.0
        %330 = vmatpush.msra.mxu0 0.0
        %331 = vmatpush.msra.mxu0 0.0
        %332 = vmatpush.msra.mxu0 0.0
        %333 = vmatpush.msra.mxu0 0.0
        %334 = vmatpush.msra.mxu0 0.0
        %335 = vmatpush.msra.mxu0 0.0
        %336 = vmatpush.msra.mxu0 0.0
        %337 = vmatpush.msra.mxu0 %v297
        %338 = vmatmul.f32.gmra.mxu0 %v289
        %v339 = vpop.f32.mrf.mxu0
        %v340 = vadd.f32 %v276, %v339
        %341 = vmatmul.f32.gmra.mxu0 %v292
        %v342 = vpop.f32.mrf.mxu0
        %v343 = vadd.f32 %v281, %v342
        %344 = vdwg.mxu0
        %v345 = vmul.f32 %v317, 0.2
        %v346 = vmul.f32 %v340, 0.2
        %v347 = vmul.f32 %v320, 0.2
        %v348 = vmul.f32 %v343, 0.2
        %v349 = vmax.f32 %v317, %v345
        %v350 = vmax.f32 %v340, %v346
        %v351 = vmax.f32 %v320, %v347
        %v352 = vmax.f32 %v343, %v348
        %354 = vset.pattern.permute.xlu0 0
        %355 = vperm.xlu0 %354, %v265
        %v356 = vpop.permute.xlu0 %355
        %359 = vset.pattern.permute.xlu0 0
        %360 = vperm.xlu0 %359, %v266
        %v361 = vpop.permute.xlu0 %360
        %vm363 = vcmask 130048
        %v365 = vsel %vm363, %v255, 0
        %v368 = vsel %vm363, %v256, 0
        %370 = vmatpush.msra.mxu0 0.0
        %371 = vmatpush.msra.mxu0 0.0
        %372 = vmatpush.msra.mxu0 0.0
        %373 = vmatpush.msra.mxu0 0.0
        %374 = vmatpush.msra.mxu0 0.0
        %375 = vmatpush.msra.mxu0 0.0
        %376 = vmatpush.msra.mxu0 0.0
        %377 = vmatpush.msra.mxu0 0.0
        %378 = vmatpush.msra.mxu0 0.0
        %379 = vmatpush.msra.mxu0 0.0
        %380 = vmatpush.msra.mxu0 0.0
        %381 = vmatpush.msra.mxu0 0.0
        %382 = vmatpush.msra.mxu0 0.0
        %383 = vmatpush.msra.mxu0 0.0
        %384 = vmatpush.msra.mxu0 %v351
        %385 = vmatpush.msra.mxu0 %v349
        %386 = vmatmul.f32.gmra.mxu0 %v365
        %v387 = vpop.f32.mrf.mxu0
        %v388 = vadd.f32 %v356, %v387
        %389 = vmatmul.f32.gmra.mxu0 %v368
        %v390 = vpop.f32.mrf.mxu0
        %v391 = vadd.f32 %v361, %v390
        %392 = vdwg.mxu0
        %393 = vmatpush.msra.mxu0 0.0
        %394 = vmatpush.msra.mxu0 0.0
        %395 = vmatpush.msra.mxu0 0.0
        %396 = vmatpush.msra.mxu0 0.0
        %397 = vmatpush.msra.mxu0 0.0
        %398 = vmatpush.msra.mxu0 0.0
        %399 = vmatpush.msra.mxu0 0.0
        %400 = vmatpush.msra.mxu0 0.0
        %401 = vmatpush.msra.mxu0 0.0
        %402 = vmatpush.msra.mxu0 0.0
        %403 = vmatpush.msra.mxu0 0.0
        %404 = vmatpush.msra.mxu0 0.0
        %405 = vmatpush.msra.mxu0 0.0
        %406 = vmatpush.msra.mxu0 0.0
        %407 = vmatpush.msra.mxu0 %v352
        %408 = vmatpush.msra.mxu0 %v350
        %409 = vmatmul.f32.gmra.mxu0 %v365
        %v410 = vpop.f32.mrf.mxu0
        %v411 = vadd.f32 %v356, %v410
        %412 = vmatmul.f32.gmra.mxu0 %v368
        %v413 = vpop.f32.mrf.mxu0
        %v414 = vadd.f32 %v361, %v413
        %415 = vdwg.mxu0
        %v416 = vmul.f32 %v388, 0.2
        %v417 = vmul.f32 %v411, 0.2
        %v418 = vmul.f32 %v391, 0.2
        %v419 = vmul.f32 %v414, 0.2
        %v420 = vmax.f32 %v388, %v416
        %v421 = vmax.f32 %v411, %v417
        %v422 = vmax.f32 %v391, %v418
        %v423 = vmax.f32 %v414, %v419
        %425 = vset.pattern.permute.xlu0 0
        %426 = vperm.xlu0 %425, %v268
        %v427 = vpop.permute.xlu0 %426
        %430 = vset.pattern.permute.xlu0 0
        %431 = vperm.xlu0 %430, %v269
        %v432 = vpop.permute.xlu0 %431
        %v435 = vsel %vm363, %v258, 0
        %v438 = vsel %vm363, %v259, 0
        %440 = vmatpush.msra.mxu0 0.0
        %441 = vmatpush.msra.mxu0 0.0
        %442 = vmatpush.msra.mxu0 0.0
        %443 = vmatpush.msra.mxu0 0.0
        %444 = vmatpush.msra.mxu0 0.0
        %445 = vmatpush.msra.mxu0 0.0
        %446 = vmatpush.msra.mxu0 0.0
        %447 = vmatpush.msra.mxu0 0.0
        %448 = vmatpush.msra.mxu0 0.0
        %449 = vmatpush.msra.mxu0 0.0
        %450 = vmatpush.msra.mxu0 0.0
        %451 = vmatpush.msra.mxu0 0.0
        %452 = vmatpush.msra.mxu0 0.0
        %453 = vmatpush.msra.mxu0 0.0
        %454 = vmatpush.msra.mxu0 %v422
        %455 = vmatpush.msra.mxu0 %v420
        %456 = vmatmul.f32.gmra.mxu0 %v435
        %v457 = vpop.f32.mrf.mxu0
        %v458 = vadd.f32 %v427, %v457
        %459 = vmatmul.f32.gmra.mxu0 %v438
        %v460 = vpop.f32.mrf.mxu0
        %v461 = vadd.f32 %v432, %v460
        %462 = vdwg.mxu0
        %463 = vmatpush.msra.mxu0 0.0
        %464 = vmatpush.msra.mxu0 0.0
        %465 = vmatpush.msra.mxu0 0.0
        %466 = vmatpush.msra.mxu0 0.0
        %467 = vmatpush.msra.mxu0 0.0
        %468 = vmatpush.msra.mxu0 0.0
        %469 = vmatpush.msra.mxu0 0.0
        %470 = vmatpush.msra.mxu0 0.0
        %471 = vmatpush.msra.mxu0 0.0
        %472 = vmatpush.msra.mxu0 0.0
        %473 = vmatpush.msra.mxu0 0.0
        %474 = vmatpush.msra.mxu0 0.0
        %475 = vmatpush.msra.mxu0 0.0
        %476 = vmatpush.msra.mxu0 0.0
        %477 = vmatpush.msra.mxu0 %v423
        %478 = vmatpush.msra.mxu0 %v421
        %479 = vmatmul.f32.gmra.mxu0 %v435
        %v480 = vpop.f32.mrf.mxu0
        %v481 = vadd.f32 %v427, %v480
        %482 = vmatmul.f32.gmra.mxu0 %v438
        %v483 = vpop.f32.mrf.mxu0
        %v484 = vadd.f32 %v432, %v483
        %485 = vdwg.mxu0
        %v486 = vmul.f32 %v458, 0.2
        %v487 = vmul.f32 %v481, 0.2
        %v488 = vmul.f32 %v461, 0.2
        %v489 = vmul.f32 %v484, 0.2
        %v490 = vmax.f32 %v458, %v486
        %v491 = vmax.f32 %v481, %v487
        %v492 = vmax.f32 %v461, %v488
        %v493 = vmax.f32 %v484, %v489
        %495 = vset.pattern.permute.xlu0 0
        %496 = vperm.xlu0 %495, %v271
        %v497 = vpop.permute.xlu0 %496
        %v500 = vsel %vm363, %v261, 0
        %502 = vmatpush.msra.mxu0 0.0
        %503 = vmatpush.msra.mxu0 0.0
        %504 = vmatpush.msra.mxu0 0.0
        %505 = vmatpush.msra.mxu0 0.0
        %506 = vmatpush.msra.mxu0 0.0
        %507 = vmatpush.msra.mxu0 0.0
        %508 = vmatpush.msra.mxu0 0.0
        %509 = vmatpush.msra.mxu0 0.0
        %510 = vmatpush.msra.mxu0 0.0
        %511 = vmatpush.msra.mxu0 0.0
        %512 = vmatpush.msra.mxu0 0.0
        %513 = vmatpush.msra.mxu0 0.0
        %514 = vmatpush.msra.mxu0 0.0
        %515 = vmatpush.msra.mxu0 0.0
        %516 = vmatpush.msra.mxu0 %v492
        %517 = vmatpush.msra.mxu0 %v490
        %518 = vmatmul.f32.gmra.mxu0 %v500
        %v519 = vpop.f32.mrf.mxu0
        %v520 = vadd.f32 %v497, %v519
        %521 = vdwg.mxu0
        %522 = vmatpush.msra.mxu0 0.0
        %523 = vmatpush.msra.mxu0 0.0
        %524 = vmatpush.msra.mxu0 0.0
        %525 = vmatpush.msra.mxu0 0.0
        %526 = vmatpush.msra.mxu0 0.0
        %527 = vmatpush.msra.mxu0 0.0
        %528 = vmatpush.msra.mxu0 0.0
        %529 = vmatpush.msra.mxu0 0.0
        %530 = vmatpush.msra.mxu0 0.0
        %531 = vmatpush.msra.mxu0 0.0
        %532 = vmatpush.msra.mxu0 0.0
        %533 = vmatpush.msra.mxu0 0.0
        %534 = vmatpush.msra.mxu0 0.0
        %535 = vmatpush.msra.mxu0 0.0
        %536 = vmatpush.msra.mxu0 %v493
        %537 = vmatpush.msra.mxu0 %v491
        %538 = vmatmul.f32.gmra.mxu0 %v500
        %v539 = vpop.f32.mrf.mxu0
        %v540 = vadd.f32 %v497, %v539
        %541 = vdwg.mxu0
        %v542 = vmul.f32 %v520, 0.2
        %v543 = vmul.f32 %v540, 0.2
        %v544 = vmax.f32 %v520, %v542
        %v545 = vmax.f32 %v540, %v543
        %v548 = vrot.slane %v545, 4
        %v549 = vsel %vm294, %v544, %v548
        %551 = vst [vmem:[%s250] sm:$0x77] %v549
        %s552 = smul.u32 2, %s22
        %p553 = scmp.lt.s32.totalorder %s21, 1
        %s554 = scalar_select %p553, %s21, 1
        %p555 = scmp.lt.s32.totalorder %s552, 1
        %s556 = scalar_select %p555, %s552, 1
        %s557 = smul.addr %s554, 2
        %s558 = sadd.s32 %s556, %s557
        %s559 = smul.addr %s558, 4
        %s560 = scalar_lea.vmem %s3, %s559
        // Predicated region
        $region37: #{tpu_custom_call.1} parent=31 // pred_check
          %p561 = pneg %p124
        $region38: #{tpu_custom_call.1} parent=31 // pred_check_branch
          %563 = sbr.rel (%p561) target = $region40
        $region39: #{tpu_custom_call.1} parent=31 // pred_region
          %s564 = smul.u32 2, %s22
        $region40: #{tpu_custom_call.1} parent=31 // pred_fallthru
          _
      $region32: #{tpu_custom_call.1} parent=5 // pred_fallthru
        _
      %p565 = scmp.le.s32.totalorder 2, %s12
      // Predicated region
      $region41: #{tpu_custom_call.1} parent=5 // pred_check
        %p566 = pneg %p565
      $region42: #{tpu_custom_call.1} parent=5 // pred_check_branch
        %568 = sbr.rel (%p566) target = $region44
      $region43: #{tpu_custom_call.1} parent=5 // pred_region
        %s569 = ssub.s32 %s12, 2
        // Predicated region
        $region45: #{tpu_custom_call.1} parent=43 // pred_check
          %p570 = pneg %p130
        $region46: #{tpu_custom_call.1} parent=43 // pred_check_branch
          %572 = sbr.rel (%p570) target = $region48
        $region47: #{tpu_custom_call.1} parent=43 // pred_region
          %s573 = smul.u32 2, %s24
          %p574 = scmp.lt.s32.totalorder %s23, 1
          %s575 = scalar_select %p574, %s23, 1
          %p576 = scmp.lt.s32.totalorder %s573, 1
          %s577 = scalar_select %p576, %s573, 1
          %s578 = smul.addr %s575, 2
          %s579 = sadd.s32 %s577, %s578
          %s580 = smul.addr %s579, 4
          %s581 = scalar_lea.vmem %s3, %s580
        $region48: #{tpu_custom_call.1} parent=43 // pred_fallthru
          _
      $region44: #{tpu_custom_call.1} parent=5 // pred_fallthru
        _
    $region6: #{tpu_custom_call.1} parent=1 // loop_footer
      %s16 = sadd.s32 1, %s12
    $region7: #{tpu_custom_call.1} parent=1 // loop_footer_branch
      %11 = sbr.rel target = $region3
    $region8: #{tpu_custom_call.1} parent=1 // loop_exit
      _
    %582 = vsyncpa [#allocation3], 1
    %s583 = scalar_lea.sflag [#allocation3], 1
    %584 = vsyncpa %s583, 1

</llo_original>
